<compile_context>
chip_gen: v7x
topology: tpu7x:2x2x1
jax: 0.10.0
libtpu: 0.0.40
codegen_flags: <defaults>
</compile_context>

<pallas_src>
import functools

import jax
import jax.numpy as jnp
from jax.experimental import pallas as pl
from jax.experimental.pallas import tpu as pltpu

NUM_HIDDEN = 128
OUT_WIDTH = 128  # packed output slab width (lane-dense, >= 2*A + 1)


def _round_up(x, m):
    return (x + m - 1) // m * m


def _ac_fused_kernel(x_ref, w1_ref, b1_ref, w2_ref, b2_ref, w3_ref, b3_ref,
                     std_ref, out_ref):
    """Fused policy+value forward for one batch tile.  Shapes (H = NUM_HIDDEN):
       x (TB,S) bf16; w1 (S,2H) bf16; w2 (2H,2H) bf16; w3 (2H,OUT_W) bf16;
       b1/b2 (1,2H) f32; b3/std (1,OUT_W) f32; out (TB,OUT_W) f32."""
    x = x_ref[...]
    h = jnp.dot(x, w1_ref[...], preferred_element_type=jnp.float32) + b1_ref[...]
    h = jnp.maximum(h, 0.0).astype(jnp.bfloat16)
    h = jnp.dot(h, w2_ref[...], preferred_element_type=jnp.float32) + b2_ref[...]
    h = jnp.maximum(h, 0.0).astype(jnp.bfloat16)
    y = jnp.dot(h, w3_ref[...], preferred_element_type=jnp.float32) + b3_ref[...]
    # std_ref holds exp(logstd) in the std columns and exactly 0 elsewhere, so a
    # single broadcast add drops policy_std into the packed output slab.
    out_ref[...] = y + std_ref[...]


def fuse_params(params, out_width=OUT_WIDTH):
    """Build fused bf16 weights + f32 biases once, outside the hot path."""
    S, H = params["pw1"].shape
    A = params["pw3"].shape[1]
    assert out_width >= 2 * A + 1 and out_width % 128 == 0
    f32, bf16 = jnp.float32, jnp.bfloat16

    w1 = jnp.concatenate([params["pw1"], params["vw1"]], axis=1)        # (S, 2H)
    b1 = jnp.concatenate([params["pb1"], params["vb1"]], axis=1)        # (1, 2H)

    z = jnp.zeros((H, H), f32)
    w2 = jnp.block([[params["pw2"], z], [z, params["vw2"]]])            # (2H, 2H)
    b2 = jnp.concatenate([params["pb2"], params["vb2"]], axis=1)        # (1, 2H)

    w3 = jnp.zeros((2 * H, out_width), f32)
    w3 = w3.at[:H, :A].set(params["pw3"])                               # mean cols
    w3 = w3.at[H:, 2 * A].set(params["vw3"][:, 0])                      # value col
    b3 = jnp.zeros((1, out_width), f32)
    b3 = b3.at[:, :A].set(params["pb3"])
    b3 = b3.at[:, 2 * A].set(params["vb3"][:, 0])

    # exp(logstd) precomputed outside the kernel; zeros outside the std columns.
    std_pad = jnp.zeros((1, out_width), f32)
    std_pad = std_pad.at[:, A:2 * A].set(jnp.exp(params["logstd"]))

    return dict(w1=w1.astype(bf16), b1=b1.astype(f32),
                w2=w2.astype(bf16), b2=b2.astype(f32),
                w3=w3.astype(bf16), b3=b3.astype(f32),
                std_pad=std_pad)


@functools.partial(jax.jit, static_argnames=("action_dim",))
def network_forward(state, fused, action_dim):
    """state: (B, *state_shape) f32.  Returns (policy_mean, policy_std, value)."""
    B = state.shape[0]
    x = state.reshape(B, -1).astype(jnp.bfloat16)          # state.view(B, -1), bf16
    S = x.shape[1]
    out_w = fused["std_pad"].shape[1]
    H2 = fused["w2"].shape[0]

    # Batch tiling: small batches run as one block; large batches pipeline in
    # 128-row tiles while the (tiny) fused weights stay VMEM-resident.
    tb = min(_round_up(B, 8), 128)
    b_pad = _round_up(B, tb)
    if b_pad != B:
        x = jnp.pad(x, ((0, b_pad - B), (0, 0)))
    grid = (b_pad // tb,)

    resident = lambda shape: pl.BlockSpec(shape, lambda i: (0, 0))
    in_specs = [
        pl.BlockSpec((tb, S), lambda i: (i, 0)),   # x        (batch-tiled)
        resident((S, H2)),                          # w1
        resident((1, H2)),                          # b1
        resident((H2, H2)),                         # w2
        resident((1, H2)),                          # b2
        resident((H2, out_w)),                      # w3
        resident((1, out_w)),                       # b3
        resident((1, out_w)),                       # std_pad
    ]
    out_spec = pl.BlockSpec((tb, out_w), lambda i: (i, 0))

    out = pl.pallas_call(
        _ac_fused_kernel,
        out_shape=jax.ShapeDtypeStruct((b_pad, out_w), jnp.float32),
        grid=grid,
        in_specs=in_specs,
        out_specs=out_spec,
        compiler_params=pltpu.CompilerParams(
            dimension_semantics=("parallel",)),
    )(x, fused["w1"], fused["b1"], fused["w2"], fused["b2"],
      fused["w3"], fused["b3"], fused["std_pad"])

    A = action_dim
    mean = out[:B, :A]
    std = out[:B, A:2 * A]
    value = out[:B, 2 * A]                                   # .squeeze(-1)
    return mean, std, value


def init_params(key, state_dim, action_dim, hidden=NUM_HIDDEN):
    """Deterministic init mimicking PyTorch nn.Linear default (U(-1/sqrt(fan_in), ..))."""
    def linear(k, fan_in, fan_out):
        kw, kb = jax.random.split(k)
        bound = 1.0 / jnp.sqrt(fan_in)
        w = jax.random.uniform(kw, (fan_in, fan_out), jnp.float32, -bound, bound)
        b = jax.random.uniform(kb, (1, fan_out), jnp.float32, -bound, bound)
        return w, b

    keys = jax.random.split(key, 6)
    pw1, pb1 = linear(keys[0], state_dim, hidden)
    pw2, pb2 = linear(keys[1], hidden, hidden)
    pw3, pb3 = linear(keys[2], hidden, action_dim)
    vw1, vb1 = linear(keys[3], state_dim, hidden)
    vw2, vb2 = linear(keys[4], hidden, hidden)
    vw3, vb3 = linear(keys[5], hidden, 1)
    logstd = jnp.zeros((1, action_dim), jnp.float32)      # nn.Parameter(torch.zeros(A))
    return dict(pw1=pw1, pb1=pb1, pw2=pw2, pb2=pb2, pw3=pw3, pb3=pb3,
                logstd=logstd,
                vw1=vw1, vb1=vb1, vw2=vw2, vb2=vb2, vw3=vw3, vb3=vb3)


def _reference_forward(state, params):
    """Pure-JAX f32 reference mirroring the PyTorch module."""
    x = state.reshape(state.shape[0], -1).astype(jnp.float32)
    h = jnp.maximum(x @ params["pw1"] + params["pb1"], 0.0)
    h = jnp.maximum(h @ params["pw2"] + params["pb2"], 0.0)
    mean = h @ params["pw3"] + params["pb3"]
    std = jnp.exp(params["logstd"]) + jnp.zeros_like(mean)
    v = jnp.maximum(x @ params["vw1"] + params["vb1"], 0.0)
    v = jnp.maximum(v @ params["vw2"] + params["vb2"], 0.0)
    value = (v @ params["vw3"] + params["vb3"])[:, 0]
    return mean, std, value


if __name__ == "__main__":
    # Small, deterministic example: batch=8, state_shape=(4, 4), action_shape=(4,)
    key = jax.random.PRNGKey(0)
    k_state, k_params = jax.random.split(key)

    B = 8
    state_shape = (4, 4)     # np.prod -> 16
    A = 4                    # np.prod(action_shape)

    state = jax.random.normal(k_state, (B,) + state_shape, dtype=jnp.float32)
    params = init_params(k_params, state_dim=16, action_dim=A)
    fused = jax.block_until_ready(fuse_params(params))    # once, outside hot path

    mean, std, value = network_forward(state, fused, action_dim=A)
    jax.block_until_ready((mean, std, value))

    # Correctness check against pure-JAX f32 reference (bf16 weights -> loose tol).
    ref_mean, ref_std, ref_value = _reference_forward(state, params)
    assert mean.shape == (B, A) and std.shape == (B, A) and value.shape == (B,)
    assert jnp.allclose(mean, ref_mean, atol=5e-2, rtol=5e-2)
    assert jnp.allclose(std, ref_std, atol=1e-5, rtol=1e-5)
    assert jnp.allclose(value, ref_value, atol=5e-2, rtol=5e-2)

    # TODO(synk): max_action is stored but unused in the PyTorch forward; the
    # torch.distributions.Normal object has no array equivalent — we return its
    # (mean, std) parameters instead.
    print("KERNEL_OK")
</pallas_src>

<mosaic_0001>
module attributes {stable_mosaic.version = 11 : i64} {
  func.func @_ac_fused_kernel(%arg0: i32, %arg1: memref<8x16xbf16, #tpu.memory_space<vmem>>, %arg2: memref<16x256xbf16, #tpu.memory_space<vmem>>, %arg3: memref<1x256xf32, #tpu.memory_space<vmem>>, %arg4: memref<256x256xbf16, #tpu.memory_space<vmem>>, %arg5: memref<1x256xf32, #tpu.memory_space<vmem>>, %arg6: memref<256x128xbf16, #tpu.memory_space<vmem>>, %arg7: memref<1x128xf32, #tpu.memory_space<vmem>>, %arg8: memref<1x128xf32, #tpu.memory_space<vmem>>, %arg9: memref<8x128xf32, #tpu.memory_space<vmem>>) attributes {dimension_semantics = [#tpu.dimension_semantics<parallel>], iteration_bounds = array<i64: 1>, scalar_prefetch = 0 : i64, scratch_operands = 0 : i64, tpu.core_type = #tpu.core_type<tc>, window_params = [{transform_indices = @transform_0, window_bounds = array<i64: 8, 16>}, {pipeline_mode = #tpu.pipeline_mode<synchronous>, transform_indices = @transform_1, window_bounds = array<i64: 16, 256>}, {pipeline_mode = #tpu.pipeline_mode<synchronous>, transform_indices = @transform_2, window_bounds = array<i64: 1, 256>}, {pipeline_mode = #tpu.pipeline_mode<synchronous>, transform_indices = @transform_3, window_bounds = array<i64: 256, 256>}, {pipeline_mode = #tpu.pipeline_mode<synchronous>, transform_indices = @transform_4, window_bounds = array<i64: 1, 256>}, {pipeline_mode = #tpu.pipeline_mode<synchronous>, transform_indices = @transform_5, window_bounds = array<i64: 256, 128>}, {pipeline_mode = #tpu.pipeline_mode<synchronous>, transform_indices = @transform_6, window_bounds = array<i64: 1, 128>}, {pipeline_mode = #tpu.pipeline_mode<synchronous>, transform_indices = @transform_7, window_bounds = array<i64: 1, 128>}, {transform_indices = @transform_8, window_bounds = array<i64: 8, 128>}]} {
    %c0 = arith.constant 0 : index
    %c0_0 = arith.constant 0 : index
    %0 = vector.load %arg1[%c0, %c0_0] : memref<8x16xbf16, #tpu.memory_space<vmem>>, vector<8x16xbf16>
    %c0_1 = arith.constant 0 : index
    %c0_2 = arith.constant 0 : index
    %1 = vector.load %arg2[%c0_1, %c0_2] : memref<16x256xbf16, #tpu.memory_space<vmem>>, vector<16x256xbf16>
    %cst = arith.constant dense<0.000000e+00> : vector<8x256xf32>
    %2 = tpu.matmul %0, %1, %cst {dimension_numbers = #tpu.dot_dimension_numbers<[1], [0], [0], [1], [0, 0, 1, 1], [], []>} : vector<8x16xbf16>, vector<16x256xbf16>, vector<8x256xf32> -> vector<8x256xf32>
    %c0_3 = arith.constant 0 : index
    %c0_4 = arith.constant 0 : index
    %3 = vector.load %arg3[%c0_3, %c0_4] : memref<1x256xf32, #tpu.memory_space<vmem>>, vector<1x256xf32>
    %4 = vector.broadcast %3 : vector<1x256xf32> to vector<8x256xf32>
    %5 = arith.addf %2, %4 : vector<8x256xf32>
    %cst_5 = arith.constant 0.000000e+00 : f32
    %6 = vector.broadcast %cst_5 : f32 to vector<8x256xf32>
    %7 = arith.maximumf %5, %6 : vector<8x256xf32>
    %8 = arith.truncf %7 : vector<8x256xf32> to vector<8x256xbf16>
    %c0_6 = arith.constant 0 : index
    %c0_7 = arith.constant 0 : index
    %9 = vector.load %arg4[%c0_6, %c0_7] : memref<256x256xbf16, #tpu.memory_space<vmem>>, vector<256x256xbf16>
    %cst_8 = arith.constant dense<0.000000e+00> : vector<8x256xf32>
    %10 = tpu.matmul %8, %9, %cst_8 {dimension_numbers = #tpu.dot_dimension_numbers<[1], [0], [0], [1], [0, 0, 1, 1], [], []>} : vector<8x256xbf16>, vector<256x256xbf16>, vector<8x256xf32> -> vector<8x256xf32>
    %c0_9 = arith.constant 0 : index
    %c0_10 = arith.constant 0 : index
    %11 = vector.load %arg5[%c0_9, %c0_10] : memref<1x256xf32, #tpu.memory_space<vmem>>, vector<1x256xf32>
    %12 = vector.broadcast %11 : vector<1x256xf32> to vector<8x256xf32>
    %13 = arith.addf %10, %12 : vector<8x256xf32>
    %cst_11 = arith.constant 0.000000e+00 : f32
    %14 = vector.broadcast %cst_11 : f32 to vector<8x256xf32>
    %15 = arith.maximumf %13, %14 : vector<8x256xf32>
    %16 = arith.truncf %15 : vector<8x256xf32> to vector<8x256xbf16>
    %c0_12 = arith.constant 0 : index
    %c0_13 = arith.constant 0 : index
    %17 = vector.load %arg6[%c0_12, %c0_13] : memref<256x128xbf16, #tpu.memory_space<vmem>>, vector<256x128xbf16>
    %cst_14 = arith.constant dense<0.000000e+00> : vector<8x128xf32>
    %18 = tpu.matmul %16, %17, %cst_14 {dimension_numbers = #tpu.dot_dimension_numbers<[1], [0], [0], [1], [0, 0, 1, 1], [], []>} : vector<8x256xbf16>, vector<256x128xbf16>, vector<8x128xf32> -> vector<8x128xf32>
    %c0_15 = arith.constant 0 : index
    %c0_16 = arith.constant 0 : index
    %19 = vector.load %arg7[%c0_15, %c0_16] : memref<1x128xf32, #tpu.memory_space<vmem>>, vector<1x128xf32>
    %20 = vector.broadcast %19 : vector<1x128xf32> to vector<8x128xf32>
    %21 = arith.addf %18, %20 : vector<8x128xf32>
    %c0_17 = arith.constant 0 : index
    %c0_18 = arith.constant 0 : index
    %22 = vector.load %arg8[%c0_17, %c0_18] : memref<1x128xf32, #tpu.memory_space<vmem>>, vector<1x128xf32>
    %23 = vector.broadcast %22 : vector<1x128xf32> to vector<8x128xf32>
    %24 = arith.addf %21, %23 : vector<8x128xf32>
    %c0_19 = arith.constant 0 : index
    %c0_20 = arith.constant 0 : index
    %25 = vector.load %arg9[%c0_19, %c0_20] : memref<8x128xf32, #tpu.memory_space<vmem>>, vector<8x128xf32>
    tpu.vector_store %arg9[%c0_19, %c0_20], %24 {strides = array<i32>} : memref<8x128xf32, #tpu.memory_space<vmem>>, vector<8x128xf32>,
    return
  }
  func.func @transform_0(%arg0: i32) -> (i32, i32) {
    %c0_i32 = arith.constant 0 : i32
    %c0_i32_0 = arith.constant 0 : i32
    return %arg0, %c0_i32 : i32, i32
  }
  func.func @transform_1(%arg0: i32) -> (i32, i32) {
    %c0_i32 = arith.constant 0 : i32
    %c0_i32_0 = arith.constant 0 : i32
    %c0_i32_1 = arith.constant 0 : i32
    return %c0_i32, %c0_i32_0 : i32, i32
  }
  func.func @transform_2(%arg0: i32) -> (i32, i32) {
    %c0_i32 = arith.constant 0 : i32
    %c0_i32_0 = arith.constant 0 : i32
    %c0_i32_1 = arith.constant 0 : i32
    return %c0_i32, %c0_i32_0 : i32, i32
  }
  func.func @transform_3(%arg0: i32) -> (i32, i32) {
    %c0_i32 = arith.constant 0 : i32
    %c0_i32_0 = arith.constant 0 : i32
    %c0_i32_1 = arith.constant 0 : i32
    return %c0_i32, %c0_i32_0 : i32, i32
  }
  func.func @transform_4(%arg0: i32) -> (i32, i32) {
    %c0_i32 = arith.constant 0 : i32
    %c0_i32_0 = arith.constant 0 : i32
    %c0_i32_1 = arith.constant 0 : i32
    return %c0_i32, %c0_i32_0 : i32, i32
  }
  func.func @transform_5(%arg0: i32) -> (i32, i32) {
    %c0_i32 = arith.constant 0 : i32
    %c0_i32_0 = arith.constant 0 : i32
    %c0_i32_1 = arith.constant 0 : i32
    return %c0_i32, %c0_i32_0 : i32, i32
  }
  func.func @transform_6(%arg0: i32) -> (i32, i32) {
    %c0_i32 = arith.constant 0 : i32
    %c0_i32_0 = arith.constant 0 : i32
    %c0_i32_1 = arith.constant 0 : i32
    return %c0_i32, %c0_i32_0 : i32, i32
  }
  func.func @transform_7(%arg0: i32) -> (i32, i32) {
    %c0_i32 = arith.constant 0 : i32
    %c0_i32_0 = arith.constant 0 : i32
    %c0_i32_1 = arith.constant 0 : i32
    return %c0_i32, %c0_i32_0 : i32, i32
  }
  func.func @transform_8(%arg0: i32) -> (i32, i32) {
    %c0_i32 = arith.constant 0 : i32
    %c0_i32_0 = arith.constant 0 : i32
    return %arg0, %c0_i32 : i32, i32
  }
}

</mosaic_0001>

<llo_original>
// kernel: network_forward.1
$region0: #{network_forward.1}
  #allocation0 [shape = 'u32[]', space=smem, size = 0x4, offset = 0x4, fixed_abs, tag = 'smem constant byte address 0x4 - core index']
  #allocation1 [shape = 'u32[144,128]{1,0:T(1,128)}', space=vmem, size = 0x12000, scoped, tag = 'internal scratch']
  %s0 = inlined_call_operand.vmem [shape: bf16[8,16], index: 0, kind: input, shape index: {}]
  %s1 = inlined_call_operand.vmem [shape: bf16[16,256], index: 1, kind: input, shape index: {}]
  %s2 = inlined_call_operand.vmem [shape: f32[1,256], index: 2, kind: input, shape index: {}]
  %s3 = inlined_call_operand.hbm [shape: bf16[256,256], index: 3, kind: input, shape index: {}]
  %s4 = inlined_call_operand.vmem [shape: f32[1,256], index: 4, kind: input, shape index: {}]
  %s5 = inlined_call_operand.hbm [shape: bf16[256,128], index: 5, kind: input, shape index: {}]
  %s6 = inlined_call_operand.vmem [shape: f32[1,128], index: 6, kind: input, shape index: {}]
  %s7 = inlined_call_operand.vmem [shape: f32[1,128], index: 7, kind: input, shape index: {}]
  %s8 = inlined_call_operand.vmem [shape: f32[8,128], index: 8, kind: output, shape index: {}]
  %s9 = sld [smem:[#allocation0]]
  $region50: #{network_forward.1} parent=0
    _
  %s11 = ssub.s32 1, %s9
  %s12 = scalar_select 0, %s11, %s9
  $region1: #{network_forward.1} parent=0
    #allocation2 [shape = 'u8[131072]{0}', space=vmem, size = 0x20000, scoped, tag = 'input window, operand 3, single buffered']
    #allocation3 [shape = 's32[1]{0}', space=sflag, size = 0x4, scoped, tag = 'scoped memory for network_forward.1']
    #allocation4 [shape = 'u8[65536]{0}', space=vmem, size = 0x10000, scoped, tag = 'input window, operand 5, single buffered']
    #allocation5 [shape = 's32[1]{0}', space=sflag, size = 0x4, scoped, tag = 'scoped memory for network_forward.1']
    %13 = vsyncpa [#allocation3], 0
    %14 = vsyncpa [#allocation5], 0
    // Predicated region
    $region2: #{network_forward.1} parent=1 // pred_check
      _
    $region3: #{network_forward.1} parent=1 // pred_check_branch
      %16 = sbr.rel (0) target = $region5
    $region4: #{network_forward.1} parent=1 // pred_region
      _
    $region5: #{network_forward.1} parent=1 // pred_fallthru
      _
    // Predicated region
    $region6: #{network_forward.1} parent=1 // pred_check
      _
    $region7: #{network_forward.1} parent=1 // pred_check_branch
      %18 = sbr.rel (0) target = $region9
    $region8: #{network_forward.1} parent=1 // pred_region
      _
    $region9: #{network_forward.1} parent=1 // pred_fallthru
      _
    // Predicated region
    $region10: #{network_forward.1} parent=1 // pred_check
      _
    $region11: #{network_forward.1} parent=1 // pred_check_branch
      %20 = sbr.rel (0) target = $region13
    $region12: #{network_forward.1} parent=1 // pred_region
      _
    $region13: #{network_forward.1} parent=1 // pred_fallthru
      _
    // Predicated region
    $region14: #{network_forward.1} parent=1 // pred_check
      _
    $region15: #{network_forward.1} parent=1 // pred_check_branch
      %22 = sbr.rel (0) target = $region17
    $region16: #{network_forward.1} parent=1 // pred_region
      %s24 = ssub.s32 4096, 4096
      %25 = vsyncadd [#allocation3], %s24
      %s26 = sshll.u32 [#allocation2], 4
      %s27 = int_to_ptr.vmem [resolvable:$true] %s26
      %32 = dma.hbm_to_vmem [thread:$0]  %s3, 4096, %s27, [#allocation3], 128, 128, 8
    $region17: #{network_forward.1} parent=1 // pred_fallthru
      _
    // Predicated region
    $region18: #{network_forward.1} parent=1 // pred_check
      _
    $region19: #{network_forward.1} parent=1 // pred_check_branch
      %34 = sbr.rel (0) target = $region21
    $region20: #{network_forward.1} parent=1 // pred_region
      _
    $region21: #{network_forward.1} parent=1 // pred_fallthru
      _
    // Predicated region
    $region22: #{network_forward.1} parent=1 // pred_check
      _
    $region23: #{network_forward.1} parent=1 // pred_check_branch
      %36 = sbr.rel (0) target = $region25
    $region24: #{network_forward.1} parent=1 // pred_region
      %s38 = ssub.s32 2048, 2048
      %39 = vsyncadd [#allocation5], %s38
      %s40 = sshll.u32 [#allocation4], 4
      %s41 = int_to_ptr.vmem [resolvable:$true] %s40
      %46 = dma.hbm_to_vmem [thread:$0]  %s5, 2048, %s41, [#allocation5], 64, 64, 4
    $region25: #{network_forward.1} parent=1 // pred_fallthru
      _
    // Predicated region
    $region26: #{network_forward.1} parent=1 // pred_check
      _
    $region27: #{network_forward.1} parent=1 // pred_check_branch
      %48 = sbr.rel (0) target = $region29
    $region28: #{network_forward.1} parent=1 // pred_region
      _
    $region29: #{network_forward.1} parent=1 // pred_fallthru
      _
    // Predicated region
    $region30: #{network_forward.1} parent=1 // pred_check
      _
    $region31: #{network_forward.1} parent=1 // pred_check_branch
      %50 = sbr.rel (0) target = $region33
    $region32: #{network_forward.1} parent=1 // pred_region
      _
    $region33: #{network_forward.1} parent=1 // pred_fallthru
      _
    // Predicated region
    $region34: #{network_forward.1} parent=1 // pred_check
      _
    $region35: #{network_forward.1} parent=1 // pred_check_branch
      %52 = sbr.rel (0) target = $region37
    $region36: #{network_forward.1} parent=1 // pred_region
      %53 = dma.done [#allocation3], 4096
    $region37: #{network_forward.1} parent=1 // pred_fallthru
      _
    // Predicated region
    $region38: #{network_forward.1} parent=1 // pred_check
      _
    $region39: #{network_forward.1} parent=1 // pred_check_branch
      %55 = sbr.rel (0) target = $region41
    $region40: #{network_forward.1} parent=1 // pred_region
      %56 = dma.done [#allocation5], 2048
    $region41: #{network_forward.1} parent=1 // pred_fallthru
      _
    %v58 = vld [vmem:[%s0] sm:$0xf]
    %v59 = vld [vmem:[%s1] sm:$0xff]
    %v60 = vld [vmem:[%s1 + $0x8] sm:$0xff]
    %v61 = vld [vmem:[%s2] sm:$0x3]
    %v63 = vlaneseq
    %v64 = vshrl.u32 %v63, 7
    %v65 = vsub.s32 0, %v64
    %v66 = vrot.slane %v61, %v65
    %v67 = vlaneseq
    %v68 = vshrl.u32 %v67, 7
    %v69 = vsub.s32 1, %v68
    %v70 = vrot.slane %v61, %v69
    %v75 = vunpack.c.l.b16 %v59
    %v76 = vunpack.c.h.b16 %v59
    %v77 = vunpack.c.l.b16 %v60
    %v78 = vunpack.c.h.b16 %v60
    %v79 = vpack.c.b16 %v77, %v75
    %v80 = vpack.c.b16 %v78, %v76
    %vm83 = vcmask 130048
    %v85 = vsel %vm83, %v58, 0
    %87 = vmatprep.subr.bf16.mxu0 %v80
    %88 = vmatpush1.bf16.msra.mxu0 %v79
    %89 = vmatprep.subr.bf16.mxu0 0
    %90 = vmatpush1.bf16.msra.mxu0 0
    %91 = vmatprep.subr.bf16.mxu0 0
    %92 = vmatpush1.bf16.msra.mxu0 0
    %93 = vmatprep.subr.bf16.mxu0 0
    %94 = vmatpush1.bf16.msra.mxu0 0
    %95 = vmatprep.subr.bf16.mxu0 0
    %96 = vmatpush1.bf16.msra.mxu0 0
    %97 = vmatprep.subr.bf16.mxu0 0
    %98 = vmatpush1.bf16.msra.mxu0 0
    %99 = vmatprep.subr.bf16.mxu0 0
    %100 = vmatpush1.bf16.msra.mxu0 0
    %101 = vmatprep.subr.bf16.mxu0 0
    %102 = vmatpush1.bf16.msra.mxu0 0
    %103 = vmatprep.subr.bf16.mxu0 0
    %104 = vmatpush1.bf16.msra.mxu0 0
    %105 = vmatprep.subr.bf16.mxu0 0
    %106 = vmatpush1.bf16.msra.mxu0 0
    %107 = vmatprep.subr.bf16.mxu0 0
    %108 = vmatpush1.bf16.msra.mxu0 0
    %109 = vmatprep.subr.bf16.mxu0 0
    %110 = vmatpush1.bf16.msra.mxu0 0
    %111 = vmatprep.subr.bf16.mxu0 0
    %112 = vmatpush1.bf16.msra.mxu0 0
    %113 = vmatprep.subr.bf16.mxu0 0
    %114 = vmatpush1.bf16.msra.mxu0 0
    %115 = vmatprep.subr.bf16.mxu0 0
    %116 = vmatpush1.bf16.msra.mxu0 0
    %117 = vmatprep.subr.bf16.mxu0 0
    %118 = vmatpush1.bf16.msra.mxu0 0
    %119 = vmatprep.mubr.bf16.mxu0 0
    %120 = vmatmul.mubr.bf16.gmra.mrb[0].mxu0 %v85
    %v121 = vpop.f32.mrb[0].mxu0
    %v122 = vadd.f32 %v66, %v121
    %v123 = vpop.f32.mrb[0].mxu0
    %v124 = vadd.f32 %v70, %v123
    %v125 = vpop.f32.mrb[0].mxu0
    %v126 = vpop.f32.mrb[0].mxu0
    %127 = vdwg.mxu0
    %v128 = vmax.f32 %v122, 0.0
    %v129 = vmax.f32 %v124, 0.0
    %v130 = vpack.c.bf16 %v128, %v128
    %v131 = vpack.c.bf16 %v129, %v129
    %v132 = vld [vmem:[#allocation2] sm:$0xff]
    %v133 = vld [vmem:[#allocation2 + $0x8] sm:$0xff]
    %v134 = vld [vmem:[#allocation2 + $0x10] sm:$0xff]
    %v135 = vld [vmem:[#allocation2 + $0x18] sm:$0xff]
    %v136 = vld [vmem:[#allocation2 + $0x20] sm:$0xff]
    %v137 = vld [vmem:[#allocation2 + $0x28] sm:$0xff]
    %v138 = vld [vmem:[#allocation2 + $0x30] sm:$0xff]
    %v139 = vld [vmem:[#allocation2 + $0x38] sm:$0xff]
    %v140 = vld [vmem:[#allocation2 + $0x40] sm:$0xff]
    %v141 = vld [vmem:[#allocation2 + $0x48] sm:$0xff]
    %v142 = vld [vmem:[#allocation2 + $0x50] sm:$0xff]
    %v143 = vld [vmem:[#allocation2 + $0x58] sm:$0xff]
    %v144 = vld [vmem:[#allocation2 + $0x60] sm:$0xff]
    %v145 = vld [vmem:[#allocation2 + $0x68] sm:$0xff]
    %v146 = vld [vmem:[#allocation2 + $0x70] sm:$0xff]
    %v147 = vld [vmem:[#allocation2 + $0x78] sm:$0xff]
    %v148 = vld [vmem:[#allocation2 + $0x80] sm:$0xff]
    %v149 = vld [vmem:[#allocation2 + $0x88] sm:$0xff]
    %v150 = vld [vmem:[#allocation2 + $0x90] sm:$0xff]
    %v151 = vld [vmem:[#allocation2 + $0x98] sm:$0xff]
    %v152 = vld [vmem:[#allocation2 + $0xa0] sm:$0xff]
    %v153 = vld [vmem:[#allocation2 + $0xa8] sm:$0xff]
    %v154 = vld [vmem:[#allocation2 + $0xb0] sm:$0xff]
    %v155 = vld [vmem:[#allocation2 + $0xb8] sm:$0xff]
    %v156 = vld [vmem:[#allocation2 + $0xc0] sm:$0xff]
    %v157 = vld [vmem:[#allocation2 + $0xc8] sm:$0xff]
    %v158 = vld [vmem:[#allocation2 + $0xd0] sm:$0xff]
    %v159 = vld [vmem:[#allocation2 + $0xd8] sm:$0xff]
    %v160 = vld [vmem:[#allocation2 + $0xe0] sm:$0xff]
    %v161 = vld [vmem:[#allocation2 + $0xe8] sm:$0xff]
    %v162 = vld [vmem:[#allocation2 + $0xf0] sm:$0xff]
    %v163 = vld [vmem:[#allocation2 + $0xf8] sm:$0xff]
    %v164 = vld [vmem:[%s4] sm:$0x3]
    %v166 = vlaneseq
    %v167 = vshrl.u32 %v166, 7
    %v168 = vsub.s32 0, %v167
    %v169 = vrot.slane %v164, %v168
    %v170 = vlaneseq
    %v171 = vshrl.u32 %v170, 7
    %v172 = vsub.s32 1, %v171
    %v173 = vrot.slane %v164, %v172
    %v208 = vunpack.c.l.b16 %v132
    %v209 = vunpack.c.h.b16 %v132
    %v210 = vunpack.c.l.b16 %v133
    %v211 = vunpack.c.h.b16 %v133
    %v212 = vunpack.c.l.b16 %v134
    %v213 = vunpack.c.h.b16 %v134
    %v214 = vunpack.c.l.b16 %v135
    %v215 = vunpack.c.h.b16 %v135
    %v216 = vunpack.c.l.b16 %v136
    %v217 = vunpack.c.h.b16 %v136
    %v218 = vunpack.c.l.b16 %v137
    %v219 = vunpack.c.h.b16 %v137
    %v220 = vunpack.c.l.b16 %v138
    %v221 = vunpack.c.h.b16 %v138
    %v222 = vunpack.c.l.b16 %v139
    %v223 = vunpack.c.h.b16 %v139
    %v224 = vunpack.c.l.b16 %v140
    %v225 = vunpack.c.h.b16 %v140
    %v226 = vunpack.c.l.b16 %v141
    %v227 = vunpack.c.h.b16 %v141
    %v228 = vunpack.c.l.b16 %v142
    %v229 = vunpack.c.h.b16 %v142
    %v230 = vunpack.c.l.b16 %v143
    %v231 = vunpack.c.h.b16 %v143
    %v232 = vunpack.c.l.b16 %v144
    %v233 = vunpack.c.h.b16 %v144
    %v234 = vunpack.c.l.b16 %v145
    %v235 = vunpack.c.h.b16 %v145
    %v236 = vunpack.c.l.b16 %v146
    %v237 = vunpack.c.h.b16 %v146
    %v238 = vunpack.c.l.b16 %v147
    %v239 = vunpack.c.h.b16 %v147
    %v240 = vunpack.c.l.b16 %v148
    %v241 = vunpack.c.h.b16 %v148
    %v242 = vunpack.c.l.b16 %v149
    %v243 = vunpack.c.h.b16 %v149
    %v244 = vunpack.c.l.b16 %v150
    %v245 = vunpack.c.h.b16 %v150
    %v246 = vunpack.c.l.b16 %v151
    %v247 = vunpack.c.h.b16 %v151
    %v248 = vunpack.c.l.b16 %v152
    %v249 = vunpack.c.h.b16 %v152
    %v250 = vunpack.c.l.b16 %v153
    %v251 = vunpack.c.h.b16 %v153
    %v252 = vunpack.c.l.b16 %v154
    %v253 = vunpack.c.h.b16 %v154
    %v254 = vunpack.c.l.b16 %v155
    %v255 = vunpack.c.h.b16 %v155
    %v256 = vunpack.c.l.b16 %v156
    %v257 = vunpack.c.h.b16 %v156
    %v258 = vunpack.c.l.b16 %v157
    %v259 = vunpack.c.h.b16 %v157
    %v260 = vunpack.c.l.b16 %v158
    %v261 = vunpack.c.h.b16 %v158
    %v262 = vunpack.c.l.b16 %v159
    %v263 = vunpack.c.h.b16 %v159
    %v264 = vunpack.c.l.b16 %v160
    %v265 = vunpack.c.h.b16 %v160
    %v266 = vunpack.c.l.b16 %v161
    %v267 = vunpack.c.h.b16 %v161
    %v268 = vunpack.c.l.b16 %v162
    %v269 = vunpack.c.h.b16 %v162
    %v270 = vunpack.c.l.b16 %v163
    %v271 = vunpack.c.h.b16 %v163
    %v272 = vpack.c.b16 %v210, %v208
    %v273 = vpack.c.b16 %v211, %v209
    %v274 = vpack.c.b16 %v214, %v212
    %v275 = vpack.c.b16 %v215, %v213
    %v276 = vpack.c.b16 %v218, %v216
    %v277 = vpack.c.b16 %v219, %v217
    %v278 = vpack.c.b16 %v222, %v220
    %v279 = vpack.c.b16 %v223, %v221
    %v280 = vpack.c.b16 %v226, %v224
    %v281 = vpack.c.b16 %v227, %v225
    %v282 = vpack.c.b16 %v230, %v228
    %v283 = vpack.c.b16 %v231, %v229
    %v284 = vpack.c.b16 %v234, %v232
    %v285 = vpack.c.b16 %v235, %v233
    %v286 = vpack.c.b16 %v238, %v236
    %v287 = vpack.c.b16 %v239, %v237
    %v288 = vpack.c.b16 %v242, %v240
    %v289 = vpack.c.b16 %v243, %v241
    %v290 = vpack.c.b16 %v246, %v244
    %v291 = vpack.c.b16 %v247, %v245
    %v292 = vpack.c.b16 %v250, %v248
    %v293 = vpack.c.b16 %v251, %v249
    %v294 = vpack.c.b16 %v254, %v252
    %v295 = vpack.c.b16 %v255, %v253
    %v296 = vpack.c.b16 %v258, %v256
    %v297 = vpack.c.b16 %v259, %v257
    %v298 = vpack.c.b16 %v262, %v260
    %v299 = vpack.c.b16 %v263, %v261
    %v300 = vpack.c.b16 %v266, %v264
    %v301 = vpack.c.b16 %v267, %v265
    %v302 = vpack.c.b16 %v270, %v268
    %v303 = vpack.c.b16 %v271, %v269
    %336 = vmatprep.subr.bf16.mxu0 %v273
    %337 = vmatpush1.bf16.msra.mxu0 %v272
    %338 = vmatprep.subr.bf16.mxu0 %v275
    %339 = vmatpush1.bf16.msra.mxu0 %v274
    %340 = vmatprep.subr.bf16.mxu0 %v277
    %341 = vmatpush1.bf16.msra.mxu0 %v276
    %342 = vmatprep.subr.bf16.mxu0 %v279
    %343 = vmatpush1.bf16.msra.mxu0 %v278
    %344 = vmatprep.subr.bf16.mxu0 %v281
    %345 = vmatpush1.bf16.msra.mxu0 %v280
    %346 = vmatprep.subr.bf16.mxu0 %v283
    %347 = vmatpush1.bf16.msra.mxu0 %v282
    %348 = vmatprep.subr.bf16.mxu0 %v285
    %349 = vmatpush1.bf16.msra.mxu0 %v284
    %350 = vmatprep.subr.bf16.mxu0 %v287
    %351 = vmatpush1.bf16.msra.mxu0 %v286
    %352 = vmatprep.subr.bf16.mxu0 %v289
    %353 = vmatpush1.bf16.msra.mxu0 %v288
    %354 = vmatprep.subr.bf16.mxu0 %v291
    %355 = vmatpush1.bf16.msra.mxu0 %v290
    %356 = vmatprep.subr.bf16.mxu0 %v293
    %357 = vmatpush1.bf16.msra.mxu0 %v292
    %358 = vmatprep.subr.bf16.mxu0 %v295
    %359 = vmatpush1.bf16.msra.mxu0 %v294
    %360 = vmatprep.subr.bf16.mxu0 %v297
    %361 = vmatpush1.bf16.msra.mxu0 %v296
    %362 = vmatprep.subr.bf16.mxu0 %v299
    %363 = vmatpush1.bf16.msra.mxu0 %v298
    %364 = vmatprep.subr.bf16.mxu0 %v301
    %365 = vmatpush1.bf16.msra.mxu0 %v300
    %366 = vmatprep.subr.bf16.mxu0 %v303
    %367 = vmatpush1.bf16.msra.mxu0 %v302
    %368 = vmatprep.mubr.bf16.mxu0 %v131
    %369 = vmatmul.mubr.bf16.gmra.mrb[0].mxu0 %v130
    %v370 = vpop.f32.mrb[0].mxu0
    %v371 = vadd.f32 %v169, %v370
    %v372 = vpop.f32.mrb[0].mxu0
    %v373 = vadd.f32 %v173, %v372
    %v374 = vpop.f32.mrb[0].mxu0
    %v375 = vpop.f32.mrb[0].mxu0
    %376 = vdwg.mxu0
    %v377 = vmax.f32 %v371, 0.0
    %v378 = vmax.f32 %v373, 0.0
    %v379 = vpack.c.bf16 %v377, %v377
    %v380 = vpack.c.bf16 %v378, %v378
    %v381 = vld [vmem:[#allocation4] sm:$0xf]
    %v382 = vld [vmem:[#allocation4 + $0x4] sm:$0xf]
    %v383 = vld [vmem:[#allocation4 + $0x8] sm:$0xf]
    %v384 = vld [vmem:[#allocation4 + $0xc] sm:$0xf]
    %v385 = vld [vmem:[#allocation4 + $0x10] sm:$0xf]
    %v386 = vld [vmem:[#allocation4 + $0x14] sm:$0xf]
    %v387 = vld [vmem:[#allocation4 + $0x18] sm:$0xf]
    %v388 = vld [vmem:[#allocation4 + $0x1c] sm:$0xf]
    %v389 = vld [vmem:[#allocation4 + $0x20] sm:$0xf]
    %v390 = vld [vmem:[#allocation4 + $0x24] sm:$0xf]
    %v391 = vld [vmem:[#allocation4 + $0x28] sm:$0xf]
    %v392 = vld [vmem:[#allocation4 + $0x2c] sm:$0xf]
    %v393 = vld [vmem:[#allocation4 + $0x30] sm:$0xf]
    %v394 = vld [vmem:[#allocation4 + $0x34] sm:$0xf]
    %v395 = vld [vmem:[#allocation4 + $0x38] sm:$0xf]
    %v396 = vld [vmem:[#allocation4 + $0x3c] sm:$0xf]
    %v397 = vld [vmem:[#allocation4 + $0x40] sm:$0xf]
    %v398 = vld [vmem:[#allocation4 + $0x44] sm:$0xf]
    %v399 = vld [vmem:[#allocation4 + $0x48] sm:$0xf]
    %v400 = vld [vmem:[#allocation4 + $0x4c] sm:$0xf]
    %v401 = vld [vmem:[#allocation4 + $0x50] sm:$0xf]
    %v402 = vld [vmem:[#allocation4 + $0x54] sm:$0xf]
    %v403 = vld [vmem:[#allocation4 + $0x58] sm:$0xf]
    %v404 = vld [vmem:[#allocation4 + $0x5c] sm:$0xf]
    %v405 = vld [vmem:[#allocation4 + $0x60] sm:$0xf]
    %v406 = vld [vmem:[#allocation4 + $0x64] sm:$0xf]
    %v407 = vld [vmem:[#allocation4 + $0x68] sm:$0xf]
    %v408 = vld [vmem:[#allocation4 + $0x6c] sm:$0xf]
    %v409 = vld [vmem:[#allocation4 + $0x70] sm:$0xf]
    %v410 = vld [vmem:[#allocation4 + $0x74] sm:$0xf]
    %v411 = vld [vmem:[#allocation4 + $0x78] sm:$0xf]
    %v412 = vld [vmem:[#allocation4 + $0x7c] sm:$0xf]
    %v413 = vld [vmem:[%s6] sm:$0x1]
    %v415 = vlaneseq
    %v416 = vshrl.u32 %v415, 7
    %v417 = vsub.s32 0, %v416
    %v418 = vrot.slane %v413, %v417
    %v452 = vunpack.c.l.b16 %v381
    %v453 = vunpack.c.l.b16 %v382
    %v454 = vunpack.c.l.b16 %v383
    %v455 = vunpack.c.l.b16 %v384
    %v456 = vunpack.c.l.b16 %v385
    %v457 = vunpack.c.l.b16 %v386
    %v458 = vunpack.c.l.b16 %v387
    %v459 = vunpack.c.l.b16 %v388
    %v460 = vunpack.c.l.b16 %v389
    %v461 = vunpack.c.l.b16 %v390
    %v462 = vunpack.c.l.b16 %v391
    %v463 = vunpack.c.l.b16 %v392
    %v464 = vunpack.c.l.b16 %v393
    %v465 = vunpack.c.l.b16 %v394
    %v466 = vunpack.c.l.b16 %v395
    %v467 = vunpack.c.l.b16 %v396
    %v468 = vunpack.c.l.b16 %v397
    %v469 = vunpack.c.l.b16 %v398
    %v470 = vunpack.c.l.b16 %v399
    %v471 = vunpack.c.l.b16 %v400
    %v472 = vunpack.c.l.b16 %v401
    %v473 = vunpack.c.l.b16 %v402
    %v474 = vunpack.c.l.b16 %v403
    %v475 = vunpack.c.l.b16 %v404
    %v476 = vunpack.c.l.b16 %v405
    %v477 = vunpack.c.l.b16 %v406
    %v478 = vunpack.c.l.b16 %v407
    %v479 = vunpack.c.l.b16 %v408
    %v480 = vunpack.c.l.b16 %v409
    %v481 = vunpack.c.l.b16 %v410
    %v482 = vunpack.c.l.b16 %v411
    %v483 = vunpack.c.l.b16 %v412
    %v484 = vpack.c.b16 %v453, %v452
    %v485 = vpack.c.b16 %v455, %v454
    %v486 = vpack.c.b16 %v457, %v456
    %v487 = vpack.c.b16 %v459, %v458
    %v488 = vpack.c.b16 %v461, %v460
    %v489 = vpack.c.b16 %v463, %v462
    %v490 = vpack.c.b16 %v465, %v464
    %v491 = vpack.c.b16 %v467, %v466
    %v492 = vpack.c.b16 %v469, %v468
    %v493 = vpack.c.b16 %v471, %v470
    %v494 = vpack.c.b16 %v473, %v472
    %v495 = vpack.c.b16 %v475, %v474
    %v496 = vpack.c.b16 %v477, %v476
    %v497 = vpack.c.b16 %v479, %v478
    %v498 = vpack.c.b16 %v481, %v480
    %v499 = vpack.c.b16 %v483, %v482
    %516 = vmatprep.subr.bf16.mxu0 0
    %517 = vmatpush1.bf16.msra.mxu0 %v484
    %518 = vmatprep.subr.bf16.mxu0 0
    %519 = vmatpush1.bf16.msra.mxu0 %v485
    %520 = vmatprep.subr.bf16.mxu0 0
    %521 = vmatpush1.bf16.msra.mxu0 %v486
    %522 = vmatprep.subr.bf16.mxu0 0
    %523 = vmatpush1.bf16.msra.mxu0 %v487
    %524 = vmatprep.subr.bf16.mxu0 0
    %525 = vmatpush1.bf16.msra.mxu0 %v488
    %526 = vmatprep.subr.bf16.mxu0 0
    %527 = vmatpush1.bf16.msra.mxu0 %v489
    %528 = vmatprep.subr.bf16.mxu0 0
    %529 = vmatpush1.bf16.msra.mxu0 %v490
    %530 = vmatprep.subr.bf16.mxu0 0
    %531 = vmatpush1.bf16.msra.mxu0 %v491
    %532 = vmatprep.subr.bf16.mxu0 0
    %533 = vmatpush1.bf16.msra.mxu0 %v492
    %534 = vmatprep.subr.bf16.mxu0 0
    %535 = vmatpush1.bf16.msra.mxu0 %v493
    %536 = vmatprep.subr.bf16.mxu0 0
    %537 = vmatpush1.bf16.msra.mxu0 %v494
    %538 = vmatprep.subr.bf16.mxu0 0
    %539 = vmatpush1.bf16.msra.mxu0 %v495
    %540 = vmatprep.subr.bf16.mxu0 0
    %541 = vmatpush1.bf16.msra.mxu0 %v496
    %542 = vmatprep.subr.bf16.mxu0 0
    %543 = vmatpush1.bf16.msra.mxu0 %v497
    %544 = vmatprep.subr.bf16.mxu0 0
    %545 = vmatpush1.bf16.msra.mxu0 %v498
    %546 = vmatprep.subr.bf16.mxu0 0
    %547 = vmatpush1.bf16.msra.mxu0 %v499
    %548 = vmatprep.mubr.bf16.mxu0 %v380
    %549 = vmatmul.mubr.bf16.gmra.mrb[0].mxu0 %v379
    %v550 = vpop.f32.mrb[0].mxu0
    %v551 = vadd.f32 %v418, %v550
    %v552 = vpop.f32.mrb[0].mxu0
    %v553 = vpop.f32.mrb[0].mxu0
    %v554 = vpop.f32.mrb[0].mxu0
    %555 = vdwg.mxu0
    %v556 = vld [vmem:[%s7] sm:$0x1]
    %v558 = vlaneseq
    %v559 = vshrl.u32 %v558, 7
    %v560 = vsub.s32 0, %v559
    %v561 = vrot.slane %v556, %v560
    %v563 = vadd.f32 %v551, %v561
    %564 = vst [vmem:[%s8] sm:$0xff] %v563
    // Predicated region
    $region42: #{network_forward.1} parent=1 // pred_check
      _
    $region43: #{network_forward.1} parent=1 // pred_check_branch
      %566 = sbr.rel (0) target = $region45
    $region44: #{network_forward.1} parent=1 // pred_region
      _
    $region45: #{network_forward.1} parent=1 // pred_fallthru
      _
    // Predicated region
    $region46: #{network_forward.1} parent=1 // pred_check
      _
    $region47: #{network_forward.1} parent=1 // pred_check_branch
      %568 = sbr.rel (0) target = $region49
    $region48: #{network_forward.1} parent=1 // pred_region
      _
    $region49: #{network_forward.1} parent=1 // pred_fallthru
      _
    %569 = vsyncpa [#allocation3], 1
    %570 = vsyncpa [#allocation5], 1

</llo_original>
